<compile_context>
chip_gen: v7x
topology: tpu7x:2x2x1
jax: 0.10.0
libtpu: 0.0.40
codegen_flags: <defaults>
</compile_context>

<pallas_src>
import functools

import jax
import jax.numpy as jnp
from jax.experimental import pallas as pl
from jax.experimental.pallas import tpu as pltpu

BN_EPS = 1e-5


# ------------------------------ tiling helpers ------------------------------

def _round_up(x, m):
    return (x + m - 1) // m * m


def _default_vmem_limit():
    # Generation-aware scoped-VMEM limit: ~85% of physical VMEM, capped at
    # 112 MiB (v5e/v6e have 128 MiB; v7x has 64 MiB per TensorCore).
    try:
        cap = int(pltpu.get_tpu_info().vmem_capacity_bytes)
        return min(int(cap * 0.85), 112 * 1024 * 1024)
    except Exception:  # pragma: no cover - conservative fallback
        return 48 * 1024 * 1024


VMEM_LIMIT_BYTES = _default_vmem_limit()


def _pick_tm(m_pad):
    # Prefer >=2 grid steps on the M axis when there is enough work.
    if m_pad >= 512 and m_pad % 256 == 0:
        return 256
    if m_pad % 128 == 0:
        return 128
    return m_pad  # small-M case: m_pad is already a multiple of 8


def _pick_tn(n):
    # Split wide Cout so the N axis contributes >=2 parallel steps (v7x
    # megacore) while keeping stores lane-dense.
    if n % 256 == 0 and n >= 512:
        return 256
    if n % 128 == 0 and n >= 256:
        return 128
    return n


def _pick_tk(k_pad, tm, tn):
    # Use the full (padded) K whenever the bf16 A/B tiles (double-buffered)
    # fit a modest VMEM budget -> single reduction step, no accumulator.
    budget = 20 * 1024 * 1024

    def tile_bytes(tk):
        return 2 * 2 * (tm * tk + tk * tn)  # 2 buffers x bf16 x (A + B tiles)

    if tile_bytes(k_pad) <= budget:
        return k_pad
    tk = (budget // (4 * (tm + tn))) // 128 * 128
    return int(max(128, min(tk, k_pad)))


# ----------------------------- Pallas kernels -----------------------------

def _mm_single_k_kernel(*refs, relu, fuse_add):
    """Single-K matmul with fused BN(+residual)(+ReLU) epilogue, no scratch."""
    if fuse_add:
        a_ref, b_ref, scale_ref, shift_ref, res_ref, o_ref = refs
    else:
        a_ref, b_ref, scale_ref, shift_ref, o_ref = refs
        res_ref = None
    y = jnp.dot(a_ref[...], b_ref[...], preferred_element_type=jnp.float32)
    y = y * scale_ref[...] + shift_ref[...]
    if fuse_add:
        y = y + res_ref[...].astype(jnp.float32)
    if relu:
        y = jnp.maximum(y, 0.0)
    o_ref[...] = y.astype(o_ref.dtype)


def _mm_multi_k_kernel(*refs, relu, fuse_add):
    """K-tiled matmul with f32 VMEM accumulator and fused BN(+res)+ReLU."""
    if fuse_add:
        a_ref, b_ref, scale_ref, shift_ref, res_ref, o_ref, acc_ref = refs
    else:
        a_ref, b_ref, scale_ref, shift_ref, o_ref, acc_ref = refs
        res_ref = None
    k = pl.program_id(2)

    @pl.when(k == 0)
    def _():
        acc_ref[...] = jnp.zeros_like(acc_ref)

    acc_ref[...] += jnp.dot(a_ref[...], b_ref[...],
                            preferred_element_type=jnp.float32)

    @pl.when(k == pl.num_programs(2) - 1)
    def _():
        y = acc_ref[...] * scale_ref[...] + shift_ref[...]
        if fuse_add:
            y = y + res_ref[...].astype(jnp.float32)
        if relu:
            y = jnp.maximum(y, 0.0)
        o_ref[...] = y.astype(o_ref.dtype)


def matmul_bn_act(a, b, scale, shift, *, relu, residual=None,
                  out_dtype=jnp.bfloat16):
    """out = maybe_relu((a @ b) * scale + shift [+ residual]).

    a: (M, K) activations (cast to bf16). b: (Kb, N) pre-cast bf16 weights with
    Kb = K padded to a multiple of 128 (zero rows). scale/shift: (1, N) f32.
    """
    M, K = a.shape
    Kb, N = b.shape
    assert Kb >= K and Kb % 128 == 0
    assert scale.shape == (1, N) and shift.shape == (1, N)

    m_pad = _round_up(M, 8) if M < 128 else _round_up(M, 128)
    tm = _pick_tm(m_pad)
    tn = _pick_tn(N)
    tk = _pick_tk(Kb, tm, tn)
    k_final = _round_up(Kb, tk)

    a = a.astype(jnp.bfloat16)
    if (m_pad, k_final) != (M, K):
        a = jnp.pad(a, ((0, m_pad - M), (0, k_final - K)))
    if k_final != Kb:
        b = jnp.pad(b, ((0, k_final - Kb), (0, 0)))

    gm, gn, gk = m_pad // tm, N // tn, k_final // tk
    single_k = gk == 1

    args = [a, b, scale, shift]
    fuse_add = residual is not None
    if fuse_add:
        res = residual.astype(jnp.bfloat16)
        if m_pad != M:
            res = jnp.pad(res, ((0, m_pad - M), (0, 0)))
        args.append(res)

    cost = pl.CostEstimate(
        flops=2 * M * K * N,
        transcendentals=0,
        bytes_accessed=(M * K + K * N + M * N) * 2 + 2 * N * 4
                       + (M * N * 2 if fuse_add else 0))

    if single_k:
        in_specs = [
            pl.BlockSpec((tm, tk), lambda i, j: (i, 0)),
            pl.BlockSpec((tk, tn), lambda i, j: (0, j)),
            pl.BlockSpec((1, tn), lambda i, j: (0, j)),
            pl.BlockSpec((1, tn), lambda i, j: (0, j)),
        ]
        if fuse_add:
            in_specs.append(pl.BlockSpec((tm, tn), lambda i, j: (i, j)))
        out = pl.pallas_call(
            functools.partial(_mm_single_k_kernel, relu=relu, fuse_add=fuse_add),
            out_shape=jax.ShapeDtypeStruct((m_pad, N), out_dtype),
            grid=(gm, gn),
            in_specs=in_specs,
            out_specs=pl.BlockSpec((tm, tn), lambda i, j: (i, j)),
            compiler_params=pltpu.CompilerParams(
                dimension_semantics=("parallel", "parallel"),
                vmem_limit_bytes=VMEM_LIMIT_BYTES),
            cost_estimate=cost,
        )(*args)
    else:
        in_specs = [
            pl.BlockSpec((tm, tk), lambda i, j, k: (i, k)),
            pl.BlockSpec((tk, tn), lambda i, j, k: (k, j)),
            pl.BlockSpec((1, tn), lambda i, j, k: (0, j)),
            pl.BlockSpec((1, tn), lambda i, j, k: (0, j)),
        ]
        if fuse_add:
            in_specs.append(pl.BlockSpec((tm, tn), lambda i, j, k: (i, j)))
        out = pl.pallas_call(
            functools.partial(_mm_multi_k_kernel, relu=relu, fuse_add=fuse_add),
            out_shape=jax.ShapeDtypeStruct((m_pad, N), out_dtype),
            grid=(gm, gn, gk),
            in_specs=in_specs,
            out_specs=pl.BlockSpec((tm, tn), lambda i, j, k: (i, j)),
            scratch_shapes=[pltpu.VMEM((tm, tn), jnp.float32)],
            compiler_params=pltpu.CompilerParams(
                dimension_semantics=("parallel", "parallel", "arbitrary"),
                vmem_limit_bytes=VMEM_LIMIT_BYTES),
            cost_estimate=cost,
        )(*args)
    return out[:M] if m_pad != M else out


def _maxpool_kernel(x_ref, o_ref):
    """3x3 stride-2 max pool on one padded batch element.

    x_ref: (1, Hp, Wo+1, 2*C) with even/odd padded columns interleaved along
    the (lane-dense) channel axis; o_ref: (1, Ho, Wo, C).
    """
    _, Ho, Wo, C = o_ref.shape
    x = x_ref[...]
    even = x[..., :C]      # padded columns 0, 2, 4, ...
    odd = x[..., C:]       # padded columns 1, 3, 5, ...
    # Horizontal 3-tap stride-2 max: out col k = max(2k, 2k+1, 2k+2).
    h = jnp.maximum(jnp.maximum(even[:, :, :Wo, :], odd[:, :, :Wo, :]),
                    even[:, :, 1:Wo + 1, :])          # (1, Hp, Wo, C)
    hp2 = h.reshape((Ho + 1), 2, Wo, C)               # even/odd padded rows
    ev = hp2[:, 0]
    od = hp2[:, 1]
    # Vertical 3-tap stride-2 max: out row i = max(2i, 2i+1, 2i+2).
    out = jnp.maximum(jnp.maximum(ev[:Ho], od[:Ho]), ev[1:Ho + 1])
    o_ref[...] = out.reshape(1, Ho, Wo, C)


def maxpool_3x3_s2_p1(x):
    """PyTorch MaxPool2d(kernel_size=3, stride=2, padding=1) on NHWC.

    Single Pallas kernel per batch element reading the padded slab once; no
    XLA-materialized tap slabs or intermediate tensors.
    """
    N, H, W, C = x.shape
    assert H % 2 == 0 and W % 2 == 0  # even spatial sizes only (ResNet inputs)
    Ho, Wo = H // 2, W // 2
    Hp, Wp = H + 2, W + 2
    xp = jnp.pad(x, ((0, 0), (1, 1), (1, 1), (0, 0)),
                 constant_values=float("-inf"))
    # Free, contiguous reshape: interleave column pairs into the channel axis
    # so the stride-2 taps become a lane slice (last dim 2*C is lane-dense).
    xr = xp.reshape(N, Hp, Wp // 2, 2 * C)
    return pl.pallas_call(
        _maxpool_kernel,
        out_shape=jax.ShapeDtypeStruct((N, Ho, Wo, C), x.dtype),
        grid=(N,),
        in_specs=[pl.BlockSpec((1, Hp, Wp // 2, 2 * C), lambda n: (n, 0, 0, 0))],
        out_specs=pl.BlockSpec((1, Ho, Wo, C), lambda n: (n, 0, 0, 0)),
        compiler_params=pltpu.CompilerParams(
            dimension_semantics=("parallel",),
            vmem_limit_bytes=VMEM_LIMIT_BYTES),
    )(xr)


def _mean_kernel(x_ref, o_ref, *, inv):
    # x_ref: (N, HW, C) -> mean over spatial positions, accumulated in f32.
    o_ref[...] = jnp.sum(x_ref[...].astype(jnp.float32), axis=1) * inv


def global_avg_pool(x):
    """AdaptiveAvgPool2d((1,1)) + flatten: (N, H, W, C) -> (N, C) f32."""
    N, H, W, C = x.shape
    if H * W == 1:
        # Nothing to average: a kernel here would be pure launch overhead.
        return x.reshape(N, C).astype(jnp.float32)
    xr = x.reshape(N, H * W, C)
    return pl.pallas_call(
        functools.partial(_mean_kernel, inv=1.0 / float(H * W)),
        out_shape=jax.ShapeDtypeStruct((N, C), jnp.float32),
        grid=(1,),
        in_specs=[pl.BlockSpec((N, H * W, C), lambda i: (0, 0, 0))],
        out_specs=pl.BlockSpec((N, C), lambda i: (0, 0)),
        compiler_params=pltpu.CompilerParams(
            dimension_semantics=("arbitrary",),
            vmem_limit_bytes=VMEM_LIMIT_BYTES),
    )(xr)


# --------------------------- JAX glue (layout only) ---------------------------

def conv_bn_act(x, cb, *, stride, padding, relu, residual=None):
    """x: (N,H,W,Cin) NHWC bf16; cb: prepared conv+BN params. im2col + matmul."""
    N, H, W, Cin = x.shape
    KH, KW, Cout = cb["kh"], cb["kw"], cb["cout"]
    Ho = (H + 2 * padding - KH) // stride + 1
    Wo = (W + 2 * padding - KW) // stride + 1
    if padding:
        xp = jnp.pad(x, ((0, 0), (padding, padding), (padding, padding), (0, 0)))
    else:
        xp = x
    # TODO(synk): im2col is still materialized in HBM (bf16); a true
    # implicit-GEMM conv would need manual DMA with halo/strided reads.
    patches = [xp[:, di:di + stride * Ho:stride, dj:dj + stride * Wo:stride, :]
               for di in range(KH) for dj in range(KW)]
    a = jnp.concatenate(patches, axis=-1).reshape(N * Ho * Wo, KH * KW * Cin)
    res2d = residual.reshape(N * Ho * Wo, Cout) if residual is not None else None
    out = matmul_bn_act(a, cb["b"], cb["scale"], cb["shift"],
                        relu=relu, residual=res2d)
    return out.reshape(N, Ho, Wo, Cout)


# ------------------------------ Parameters ------------------------------

def init_conv_bn(key, kh, kw, cin, cout):
    kconv, kg, kb, km, kv = jax.random.split(key, 5)
    fan_in = kh * kw * cin
    w = jax.random.normal(kconv, (kh, kw, cin, cout), jnp.float32) * (2.0 / fan_in) ** 0.5
    gamma = 1.0 + 0.1 * jax.random.normal(kg, (cout,), jnp.float32)
    beta = 0.1 * jax.random.normal(kb, (cout,), jnp.float32)
    mean = 0.1 * jax.random.normal(km, (cout,), jnp.float32)
    var = 1.0 + 0.1 * jnp.abs(jax.random.normal(kv, (cout,), jnp.float32))
    return dict(w=w, gamma=gamma, beta=beta, mean=mean, var=var)


def make_params(key):
    keys = iter(jax.random.split(key, 32))
    params = {"stem": init_conv_bn(next(keys), 7, 7, 3, 64), "layers": []}
    in_planes = 64
    for planes, first_stride in ((64, 1), (128, 2), (256, 2), (512, 2)):
        layer = []
        for bi in range(2):
            s = first_stride if bi == 0 else 1
            needs_down = (s != 1) or (in_planes != planes)
            block = {
                "stride": s,
                "conv1": init_conv_bn(next(keys), 3, 3, in_planes, planes),
                "conv2": init_conv_bn(next(keys), 3, 3, planes, planes),
                "down": init_conv_bn(next(keys), 1, 1, in_planes, planes) if needs_down else None,
            }
            layer.append(block)
            in_planes = planes
        params["layers"].append(layer)
    return params


def fold_conv_bn(p):
    """Hoisted (once-per-model) weight prep: fold BN, reshape, pad K, cast bf16."""
    kh, kw, cin, cout = p["w"].shape
    k = kh * kw * cin
    k_pad = _round_up(k, 128)
    b = p["w"].reshape(k, cout)
    if k_pad != k:
        b = jnp.pad(b, ((0, k_pad - k), (0, 0)))
    scale = p["gamma"] / jnp.sqrt(p["var"] + BN_EPS)
    shift = p["beta"] - p["mean"] * scale
    return dict(b=b.astype(jnp.bfloat16),
                scale=scale.reshape(1, cout).astype(jnp.float32),
                shift=shift.reshape(1, cout).astype(jnp.float32),
                kh=kh, kw=kw, cin=cin, cout=cout)


def prepare_params(params):
    prep = {"stem": fold_conv_bn(params["stem"]), "layers": []}
    for layer in params["layers"]:
        blocks = []
        for block in layer:
            blocks.append({
                "stride": block["stride"],
                "conv1": fold_conv_bn(block["conv1"]),
                "conv2": fold_conv_bn(block["conv2"]),
                "down": fold_conv_bn(block["down"]) if block["down"] is not None else None,
            })
        prep["layers"].append(blocks)
    return prep


# ------------------------------ Forward pass ------------------------------

def basic_block(x, bp):
    stride = bp["stride"]
    if bp["down"] is not None:
        identity = conv_bn_act(x, bp["down"], stride=stride, padding=0, relu=False)
    else:
        identity = x
    out = conv_bn_act(x, bp["conv1"], stride=stride, padding=1, relu=True)
    # Second conv: residual add + ReLU fused into the matmul epilogue.
    out = conv_bn_act(out, bp["conv2"], stride=1, padding=1, relu=True,
                      residual=identity)
    return out


def resnet18_triplet_forward(prep, images_nchw):
    """ResNet-18 backbone with fc=Identity -> (N, 512) embedding."""
    x = jnp.transpose(images_nchw, (0, 2, 3, 1)).astype(jnp.bfloat16)  # NCHW -> NHWC
    x = conv_bn_act(x, prep["stem"], stride=2, padding=3, relu=True)
    x = maxpool_3x3_s2_p1(x)
    for layer in prep["layers"]:
        for block in layer:
            x = basic_block(x, block)
    # AdaptiveAvgPool2d((1,1)) + flatten; model.fc is Identity -> embedding.
    return global_avg_pool(x)


# --------------------------------- main ---------------------------------

if __name__ == "__main__":
    key = jax.random.PRNGKey(0)
    pkey, xkey = jax.random.split(key)
    raw_params = make_params(pkey)
    prep = prepare_params(raw_params)          # one-time weight/BN folding

    # PyTorch-style NCHW input: batch=2, 3 channels, 32x32 spatial.
    images = jax.random.normal(xkey, (2, 3, 32, 32), jnp.float32)

    emb = resnet18_triplet_forward(prep, images)
    emb = jax.block_until_ready(emb)

    assert emb.shape == (2, 512), emb.shape
    assert bool(jnp.all(jnp.isfinite(emb)))
    print("KERNEL_OK")
</pallas_src>

<mosaic_0001>
module attributes {stable_mosaic.version = 11 : i64} {
  func.func @_mm_single_k_kernel(%arg0: i32, %arg1: i32, %arg2: memref<256x256xbf16, #tpu.memory_space<vmem>>, %arg3: memref<256x64xbf16, #tpu.memory_space<vmem>>, %arg4: memref<1x64xf32, #tpu.memory_space<vmem>>, %arg5: memref<1x64xf32, #tpu.memory_space<vmem>>, %arg6: memref<256x64xbf16, #tpu.memory_space<vmem>>) attributes {dimension_semantics = [#tpu.dimension_semantics<parallel>, #tpu.dimension_semantics<parallel>], iteration_bounds = array<i64: 2, 1>, scalar_prefetch = 0 : i64, scratch_operands = 0 : i64, tpu.core_type = #tpu.core_type<tc>, window_params = [{transform_indices = @transform_0, window_bounds = array<i64: 256, 256>}, {transform_indices = @transform_1, window_bounds = array<i64: 256, 64>}, {transform_indices = @transform_2, window_bounds = array<i64: 1, 64>}, {transform_indices = @transform_3, window_bounds = array<i64: 1, 64>}, {transform_indices = @transform_4, window_bounds = array<i64: 256, 64>}]} {
    %c0 = arith.constant 0 : index
    %c0_0 = arith.constant 0 : index
    %0 = vector.load %arg2[%c0, %c0_0] : memref<256x256xbf16, #tpu.memory_space<vmem>>, vector<256x256xbf16>
    %c0_1 = arith.constant 0 : index
    %c0_2 = arith.constant 0 : index
    %1 = vector.load %arg3[%c0_1, %c0_2] : memref<256x64xbf16, #tpu.memory_space<vmem>>, vector<256x64xbf16>
    %cst = arith.constant dense<0.000000e+00> : vector<256x64xf32>
    %2 = tpu.matmul %0, %1, %cst {dimension_numbers = #tpu.dot_dimension_numbers<[1], [0], [0], [1], [0, 0, 1, 1], [], []>} : vector<256x256xbf16>, vector<256x64xbf16>, vector<256x64xf32> -> vector<256x64xf32>
    %c0_3 = arith.constant 0 : index
    %c0_4 = arith.constant 0 : index
    %3 = vector.load %arg4[%c0_3, %c0_4] : memref<1x64xf32, #tpu.memory_space<vmem>>, vector<1x64xf32>
    %4 = vector.broadcast %3 : vector<1x64xf32> to vector<256x64xf32>
    %5 = arith.mulf %2, %4 : vector<256x64xf32>
    %c0_5 = arith.constant 0 : index
    %c0_6 = arith.constant 0 : index
    %6 = vector.load %arg5[%c0_5, %c0_6] : memref<1x64xf32, #tpu.memory_space<vmem>>, vector<1x64xf32>
    %7 = vector.broadcast %6 : vector<1x64xf32> to vector<256x64xf32>
    %8 = arith.addf %5, %7 : vector<256x64xf32>
    %cst_7 = arith.constant 0.000000e+00 : f32
    %9 = vector.broadcast %cst_7 : f32 to vector<256x64xf32>
    %10 = arith.maximumf %8, %9 : vector<256x64xf32>
    %11 = arith.truncf %10 : vector<256x64xf32> to vector<256x64xbf16>
    %c0_8 = arith.constant 0 : index
    %c0_9 = arith.constant 0 : index
    %12 = vector.load %arg6[%c0_8, %c0_9] : memref<256x64xbf16, #tpu.memory_space<vmem>>, vector<256x64xbf16>
    tpu.vector_store %arg6[%c0_8, %c0_9], %11 {strides = array<i32>} : memref<256x64xbf16, #tpu.memory_space<vmem>>, vector<256x64xbf16>,
    return
  }
  func.func @transform_0(%arg0: i32, %arg1: i32) -> (i32, i32) {
    %c0_i32 = arith.constant 0 : i32
    %c0_i32_0 = arith.constant 0 : i32
    return %arg0, %c0_i32 : i32, i32
  }
  func.func @transform_1(%arg0: i32, %arg1: i32) -> (i32, i32) {
    %c0_i32 = arith.constant 0 : i32
    %c0_i32_0 = arith.constant 0 : i32
    return %c0_i32, %arg1 : i32, i32
  }
  func.func @transform_2(%arg0: i32, %arg1: i32) -> (i32, i32) {
    %c0_i32 = arith.constant 0 : i32
    %c0_i32_0 = arith.constant 0 : i32
    return %c0_i32, %arg1 : i32, i32
  }
  func.func @transform_3(%arg0: i32, %arg1: i32) -> (i32, i32) {
    %c0_i32 = arith.constant 0 : i32
    %c0_i32_0 = arith.constant 0 : i32
    return %c0_i32, %arg1 : i32, i32
  }
  func.func @transform_4(%arg0: i32, %arg1: i32) -> (i32, i32) {
    %c0_i32 = arith.constant 0 : i32
    return %arg0, %arg1 : i32, i32
  }
}

</mosaic_0001>

<llo_original>
// kernel: tpu_custom_call.1
$region0: #{tpu_custom_call.1}
  #allocation0 [shape = 'u32[]', space=smem, size = 0x4, offset = 0x4, fixed_abs, tag = 'smem constant byte address 0x4 - core index']
  #allocation1 [shape = 'u32[144,128]{1,0:T(1,128)}', space=vmem, size = 0x12000, scoped, tag = 'internal scratch']
  %s0 = inlined_call_operand.hbm [shape: bf16[512,256], index: 0, kind: input, shape index: {}]
  %s1 = inlined_call_operand.vmem [shape: bf16[256,64], index: 1, kind: input, shape index: {}]
  %s2 = inlined_call_operand.vmem [shape: f32[1,64], index: 2, kind: input, shape index: {}]
  %s3 = inlined_call_operand.vmem [shape: f32[1,64], index: 3, kind: input, shape index: {}]
  %s4 = inlined_call_operand.vmem [shape: bf16[512,64], index: 4, kind: output, shape index: {}]
  %s5 = sld [smem:[#allocation0]]
  $region53: #{tpu_custom_call.1} parent=0
    _
  %s7 = ssub.s32 1, %s5
  %s8 = scalar_select 0, %s7, %s5
  $region1: #{tpu_custom_call.1} parent=0
    #allocation2 [shape = 'u8[262144]{0}', space=vmem, size = 0x40000, scoped, tag = 'input window, operand 0']
    #allocation3 [shape = 's32[2]{0}', space=sflag, size = 0x8, scoped, tag = 'scoped memory for tpu_custom_call.1']
    %9 = vsyncpa [#allocation3], 0
    %s10 = scalar_lea.sflag [#allocation3], 1
    %11 = vsyncpa %s10, 0
    loop: start=0, step=1, limit=4
    $region2: #{tpu_custom_call.1} parent=1 // loop_pre_header
      _
    $region3: #{tpu_custom_call.1} parent=1 // loop_header
      %s13 = sphi 0, %s17
      %p14 = scmp.ge.s32.totalorder %s13, 4
      %s20 = sphi 0, %s32
      %s21 = sphi 0, %s28
      %s22 = sphi 0, %s20
      %s23 = sphi 0, %s21
      %s24 = sphi 0, %s22
      %s25 = sphi 0, %s23
      %s35 = sphi 0, %s37
      %s38 = sphi 0, %s35
      %s39 = sphi 0, %s38
      %s55 = sphi 0, %s39
      %s61 = sphi 0, %s63
      %s64 = sphi 0, %s61
      %s65 = sphi 0, %s64
      %s81 = sphi 0, %s65
      %s87 = sphi 0, %s89
      %s90 = sphi 0, %s87
      %s91 = sphi 0, %s90
      %s107 = sphi 0, %s91
      %s113 = sphi 0, %s115
      %s116 = sphi 0, %s113
      %s117 = sphi 0, %s116
      %s133 = sphi 0, %s117
      %s141 = sphi 0, %s143
      %s144 = sphi 0, %s141
      %s145 = sphi 0, %s144
      %s161 = sphi 0, %s145
    $region4: #{tpu_custom_call.1} parent=1 // loop_header_branch
      %16 = sbr.rel (%p14) target = $region8
    $region5: #{tpu_custom_call.1} parent=1 // loop_body
      %s18 = ssub.s32 %s13, 1
      %s19 = ssub.s32 %s13, 2
      %s26 = sadd.s32 1, %s21
      %p27 = scmp.ge.s32.totalorder %s26, 1
      %s28 = scalar_select %p27, 0, %s26
      %s29 = sadd.s32 1, %s20
      %s30 = scalar_select %p27, %s29, %s20
      %p31 = scmp.ge.s32.totalorder %s30, 2
      %s32 = scalar_select %p31, 0, %s30
      %s33 = ssub.s32 %s20, %s32
      %p34 = scmp.eq.s32.totalorder %s33, 0
      %s36 = sadd.s32 %s35, 1
      %s37 = scalar_select %p34, %s35, %s36
      %p40 = pneg %p34
      %p41 = scmp.eq.s32.totalorder %s13, 1
      %p42 = por %p40, %p41
      %p43 = scmp.ne.s32.totalorder %s35, %s38
      %p44 = scmp.eq.s32.totalorder %s13, 0
      %p45 = por %p43, %p44
      %p46 = scmp.ne.s32.totalorder %s35, %s38
      %p47 = scmp.eq.s32.totalorder %s18, 1
      %p48 = por %p46, %p47
      %p49 = scmp.ne.s32.totalorder %s38, %s39
      %p50 = scmp.eq.s32.totalorder %s18, 0
      %p51 = por %p49, %p50
      %p52 = scmp.ne.s32.totalorder %s38, %s39
      %p53 = scmp.eq.s32.totalorder %s19, 1
      %p54 = por %p52, %p53
      %p56 = scmp.ne.s32.totalorder %s39, %s55
      %p57 = scmp.eq.s32.totalorder %s19, 0
      %p58 = por %p56, %p57
      %s59 = ssub.s32 %s21, %s28
      %p60 = scmp.eq.s32.totalorder %s59, 0
      %s62 = sadd.s32 %s61, 1
      %s63 = scalar_select %p60, %s61, %s62
      %p66 = pneg %p60
      %p67 = scmp.eq.s32.totalorder %s13, 1
      %p68 = por %p66, %p67
      %p69 = scmp.ne.s32.totalorder %s61, %s64
      %p70 = scmp.eq.s32.totalorder %s13, 0
      %p71 = por %p69, %p70
      %p72 = scmp.ne.s32.totalorder %s61, %s64
      %p73 = scmp.eq.s32.totalorder %s18, 1
      %p74 = por %p72, %p73
      %p75 = scmp.ne.s32.totalorder %s64, %s65
      %p76 = scmp.eq.s32.totalorder %s18, 0
      %p77 = por %p75, %p76
      %p78 = scmp.ne.s32.totalorder %s64, %s65
      %p79 = scmp.eq.s32.totalorder %s19, 1
      %p80 = por %p78, %p79
      %p82 = scmp.ne.s32.totalorder %s65, %s81
      %p83 = scmp.eq.s32.totalorder %s19, 0
      %p84 = por %p82, %p83
      %s85 = ssub.s32 %s21, %s28
      %p86 = scmp.eq.s32.totalorder %s85, 0
      %s88 = sadd.s32 %s87, 1
      %s89 = scalar_select %p86, %s87, %s88
      %p92 = pneg %p86
      %p93 = scmp.eq.s32.totalorder %s13, 1
      %p94 = por %p92, %p93
      %p95 = scmp.ne.s32.totalorder %s87, %s90
      %p96 = scmp.eq.s32.totalorder %s13, 0
      %p97 = por %p95, %p96
      %p98 = scmp.ne.s32.totalorder %s87, %s90
      %p99 = scmp.eq.s32.totalorder %s18, 1
      %p100 = por %p98, %p99
      %p101 = scmp.ne.s32.totalorder %s90, %s91
      %p102 = scmp.eq.s32.totalorder %s18, 0
      %p103 = por %p101, %p102
      %p104 = scmp.ne.s32.totalorder %s90, %s91
      %p105 = scmp.eq.s32.totalorder %s19, 1
      %p106 = por %p104, %p105
      %p108 = scmp.ne.s32.totalorder %s91, %s107
      %p109 = scmp.eq.s32.totalorder %s19, 0
      %p110 = por %p108, %p109
      %s111 = ssub.s32 %s21, %s28
      %p112 = scmp.eq.s32.totalorder %s111, 0
      %s114 = sadd.s32 %s113, 1
      %s115 = scalar_select %p112, %s113, %s114
      %p118 = pneg %p112
      %p119 = scmp.eq.s32.totalorder %s13, 1
      %p120 = por %p118, %p119
      %p121 = scmp.ne.s32.totalorder %s113, %s116
      %p122 = scmp.eq.s32.totalorder %s13, 0
      %p123 = por %p121, %p122
      %p124 = scmp.ne.s32.totalorder %s113, %s116
      %p125 = scmp.eq.s32.totalorder %s18, 1
      %p126 = por %p124, %p125
      %p127 = scmp.ne.s32.totalorder %s116, %s117
      %p128 = scmp.eq.s32.totalorder %s18, 0
      %p129 = por %p127, %p128
      %p130 = scmp.ne.s32.totalorder %s116, %s117
      %p131 = scmp.eq.s32.totalorder %s19, 1
      %p132 = por %p130, %p131
      %p134 = scmp.ne.s32.totalorder %s117, %s133
      %p135 = scmp.eq.s32.totalorder %s19, 0
      %p136 = por %p134, %p135
      %s137 = ssub.s32 %s20, %s32
      %s138 = ssub.s32 %s21, %s28
      %s139 = sor.u32 %s137, %s138
      %p140 = scmp.eq.s32.totalorder %s139, 0
      %s142 = sadd.s32 %s141, 1
      %s143 = scalar_select %p140, %s141, %s142
      %p146 = pneg %p140
      %p147 = scmp.eq.s32.totalorder %s13, 1
      %p148 = por %p146, %p147
      %p149 = scmp.ne.s32.totalorder %s141, %s144
      %p150 = scmp.eq.s32.totalorder %s13, 0
      %p151 = por %p149, %p150
      %p152 = scmp.ne.s32.totalorder %s141, %s144
      %p153 = scmp.eq.s32.totalorder %s18, 1
      %p154 = por %p152, %p153
      %p155 = scmp.ne.s32.totalorder %s144, %s145
      %p156 = scmp.eq.s32.totalorder %s18, 0
      %p157 = por %p155, %p156
      %p158 = scmp.ne.s32.totalorder %s144, %s145
      %p159 = scmp.eq.s32.totalorder %s19, 1
      %p160 = por %p158, %p159
      %p162 = scmp.ne.s32.totalorder %s145, %s161
      %p163 = scmp.eq.s32.totalorder %s19, 0
      %p164 = por %p162, %p163
      %p165 = scmp.le.s32.totalorder 1, %s13
      %p166 = scmp.lt.s32.totalorder %s13, 3
      %p167 = pnand %p165, %p166
      %p168 = pneg %p167
      // Predicated region
      $region9: #{tpu_custom_call.1} parent=5 // pred_check
        _
      $region10: #{tpu_custom_call.1} parent=5 // pred_check_branch
        %170 = sbr.rel (%p167) target = $region12
      $region11: #{tpu_custom_call.1} parent=5 // pred_region
        %s171 = ssub.s32 %s13, 1
        // Predicated region
        $region13: #{tpu_custom_call.1} parent=11 // pred_check
          %p172 = pneg %p77
        $region14: #{tpu_custom_call.1} parent=11 // pred_check_branch
          %174 = sbr.rel (%p172) target = $region16
        $region15: #{tpu_custom_call.1} parent=11 // pred_region
          %p175 = scmp.lt.s32.totalorder %s23, 0
          %s176 = scalar_select %p175, %s23, 0
          %s177 = smul.addr %s176, 4
          %s178 = scalar_lea.vmem %s1, %s177
        $region16: #{tpu_custom_call.1} parent=11 // pred_fallthru
          _
        // Predicated region
        $region17: #{tpu_custom_call.1} parent=11 // pred_check
          %p179 = pneg %p103
        $region18: #{tpu_custom_call.1} parent=11 // pred_check_branch
          %181 = sbr.rel (%p179) target = $region20
        $region19: #{tpu_custom_call.1} parent=11 // pred_region
          %p182 = scmp.lt.s32.totalorder %s23, 0
          %s183 = scalar_select %p182, %s23, 0
          %s184 = scalar_lea.vmem %s2, %s183
        $region20: #{tpu_custom_call.1} parent=11 // pred_fallthru
          _
        // Predicated region
        $region21: #{tpu_custom_call.1} parent=11 // pred_check
          %p185 = pneg %p129
        $region22: #{tpu_custom_call.1} parent=11 // pred_check_branch
          %187 = sbr.rel (%p185) target = $region24
        $region23: #{tpu_custom_call.1} parent=11 // pred_region
          %p188 = scmp.lt.s32.totalorder %s23, 0
          %s189 = scalar_select %p188, %s23, 0
          %s190 = scalar_lea.vmem %s3, %s189
        $region24: #{tpu_custom_call.1} parent=11 // pred_fallthru
          _
      $region12: #{tpu_custom_call.1} parent=5 // pred_fallthru
        _
      %p191 = scmp.lt.s32.totalorder %s13, 2
      // Predicated region
      $region25: #{tpu_custom_call.1} parent=5 // pred_check
        %p192 = pneg %p191
      $region26: #{tpu_custom_call.1} parent=5 // pred_check_branch
        %194 = sbr.rel (%p192) target = $region28
      $region27: #{tpu_custom_call.1} parent=5 // pred_region
        // Predicated region
        $region29: #{tpu_custom_call.1} parent=27 // pred_check
          %p195 = pneg %p45
        $region30: #{tpu_custom_call.1} parent=27 // pred_check_branch
          %197 = sbr.rel (%p195) target = $region32
        $region31: #{tpu_custom_call.1} parent=27 // pred_region
          %s198 = sand.u32 %s35, 1
          %s199 = scalar_lea.sflag [#allocation3], %s198
          %s200 = sand.u32 %s35, 1
          %s201 = smul.addr %s200, 256
          %s202 = scalar_lea.vmem [#allocation2], %s201
          %s203 = smul.u32 32, %s20
          %s205 = ssub.s32 4096, 4096
          %206 = vsyncadd %s199, %s205
          %s207 = smul.addr %s203, 2
          %s208 = smul.addr %s207, 64
          %s209 = scalar_lea.hbm %s0, %s208
          %s210 = sshll.u32 %s202, 4
          %s211 = int_to_ptr.vmem [resolvable:$true] %s210
          %216 = dma.hbm_to_vmem [thread:$0]  %s209, 4096, %s211, %s199, 128, 128, 8
        $region32: #{tpu_custom_call.1} parent=27 // pred_fallthru
          _
      $region28: #{tpu_custom_call.1} parent=5 // pred_fallthru
        _
      %p217 = scmp.le.s32.totalorder 1, %s13
      %p218 = scmp.lt.s32.totalorder %s13, 3
      %p219 = pnand %p217, %p218
      %p220 = pneg %p219
      // Predicated region
      $region33: #{tpu_custom_call.1} parent=5 // pred_check
        _
      $region34: #{tpu_custom_call.1} parent=5 // pred_check_branch
        %222 = sbr.rel (%p219) target = $region36
      $region35: #{tpu_custom_call.1} parent=5 // pred_region
        %s223 = ssub.s32 %s13, 1
        %s224 = sand.u32 %s38, 1
        %s225 = scalar_lea.sflag [#allocation3], %s224
        %s226 = sand.u32 %s38, 1
        %s227 = smul.addr %s226, 256
        %s228 = scalar_lea.vmem [#allocation2], %s227
        // Predicated region
        $region37: #{tpu_custom_call.1} parent=35 // pred_check
          %p229 = pneg %p51
        $region38: #{tpu_custom_call.1} parent=35 // pred_check_branch
          %231 = sbr.rel (%p229) target = $region40
        $region39: #{tpu_custom_call.1} parent=35 // pred_region
          %232 = dma.done %s225, 4096
        $region40: #{tpu_custom_call.1} parent=35 // pred_fallthru
          _
        %s233 = sand.u32 %s38, 1
        %s234 = scalar_lea.sflag [#allocation3], %s233
        %s235 = sand.u32 %s38, 1
        %s236 = smul.addr %s235, 256
        %s237 = scalar_lea.vmem [#allocation2], %s236
        %p238 = pneg %p51
        %p239 = pneg %p48
        %p240 = scmp.lt.s32.totalorder %s23, 0
        %s241 = scalar_select %p240, %s23, 0
        %s242 = smul.addr %s241, 4
        %s243 = scalar_lea.vmem %s1, %s242
        %p244 = pneg %p77
        %p245 = pneg %p74
        %p246 = scmp.lt.s32.totalorder %s23, 0
        %s247 = scalar_select %p246, %s23, 0
        %s248 = scalar_lea.vmem %s2, %s247
        %p249 = pneg %p103
        %p250 = pneg %p100
        %p251 = scmp.lt.s32.totalorder %s23, 0
        %s252 = scalar_select %p251, %s23, 0
        %s253 = scalar_lea.vmem %s3, %s252
        %p254 = pneg %p129
        %p255 = pneg %p126
        %p256 = pneg %p157
        %p257 = pneg %p154
        %s258 = smul.u32 32, %s22
        %p259 = scmp.lt.s32.totalorder %s258, 63
        %s260 = scalar_select %p259, %s258, 63
        %p261 = scmp.lt.s32.totalorder %s23, 0
        %s262 = scalar_select %p261, %s23, 0
        %s263 = sadd.s32 %s262, %s260
        %s264 = smul.addr %s263, 4
        %s265 = scalar_lea.vmem %s4, %s264
        %s266 = smul.u32 32, %s22
        %p267 = scmp.lt.s32.totalorder %s23, 0
        %s268 = scalar_select %p267, %s23, 0
        %s269 = smul.addr %s268, 4
        %s270 = scalar_lea.vmem %s1, %s269
        %p271 = scmp.lt.s32.totalorder %s23, 0
        %s272 = scalar_select %p271, %s23, 0
        %s273 = scalar_lea.vmem %s2, %s272
        %p274 = scmp.lt.s32.totalorder %s23, 0
        %s275 = scalar_select %p274, %s23, 0
        %s276 = scalar_lea.vmem %s3, %s275
        %s277 = smul.u32 32, %s22
        %p278 = scmp.lt.s32.totalorder %s277, 63
        %s279 = scalar_select %p278, %s277, 63
        %p280 = scmp.lt.s32.totalorder %s23, 0
        %s281 = scalar_select %p280, %s23, 0
        %s282 = sadd.s32 %s281, %s279
        %s283 = smul.addr %s282, 4
        %s284 = scalar_lea.vmem %s4, %s283
        %s285 = smul.u32 32, %s22
        %v287 = vld [vmem:[%s228] sm:$0xff]
        %v288 = vld [vmem:[%s228 + $0x8] sm:$0xff]
        %v289 = vld [vmem:[%s228 + $0x10] sm:$0xff]
        %v290 = vld [vmem:[%s228 + $0x18] sm:$0xff]
        %v291 = vld [vmem:[%s228 + $0x20] sm:$0xff]
        %v292 = vld [vmem:[%s228 + $0x28] sm:$0xff]
        %v293 = vld [vmem:[%s228 + $0x30] sm:$0xff]
        %v294 = vld [vmem:[%s228 + $0x38] sm:$0xff]
        %v295 = vld [vmem:[%s228 + $0x40] sm:$0xff]
        %v296 = vld [vmem:[%s228 + $0x48] sm:$0xff]
        %v297 = vld [vmem:[%s228 + $0x50] sm:$0xff]
        %v298 = vld [vmem:[%s228 + $0x58] sm:$0xff]
        %v299 = vld [vmem:[%s228 + $0x60] sm:$0xff]
        %v300 = vld [vmem:[%s228 + $0x68] sm:$0xff]
        %v301 = vld [vmem:[%s228 + $0x70] sm:$0xff]
        %v302 = vld [vmem:[%s228 + $0x78] sm:$0xff]
        %v303 = vld [vmem:[%s228 + $0x80] sm:$0xff]
        %v304 = vld [vmem:[%s228 + $0x88] sm:$0xff]
        %v305 = vld [vmem:[%s228 + $0x90] sm:$0xff]
        %v306 = vld [vmem:[%s228 + $0x98] sm:$0xff]
        %v307 = vld [vmem:[%s228 + $0xa0] sm:$0xff]
        %v308 = vld [vmem:[%s228 + $0xa8] sm:$0xff]
        %v309 = vld [vmem:[%s228 + $0xb0] sm:$0xff]
        %v310 = vld [vmem:[%s228 + $0xb8] sm:$0xff]
        %v311 = vld [vmem:[%s228 + $0xc0] sm:$0xff]
        %v312 = vld [vmem:[%s228 + $0xc8] sm:$0xff]
        %v313 = vld [vmem:[%s228 + $0xd0] sm:$0xff]
        %v314 = vld [vmem:[%s228 + $0xd8] sm:$0xff]
        %v315 = vld [vmem:[%s228 + $0xe0] sm:$0xff]
        %v316 = vld [vmem:[%s228 + $0xe8] sm:$0xff]
        %v317 = vld [vmem:[%s228 + $0xf0] sm:$0xff]
        %v318 = vld [vmem:[%s228 + $0xf8] sm:$0xff]
        %v319 = vld [vmem:[%s270] sm:$0xf]
        %v320 = vld [vmem:[%s270 + $0x4] sm:$0xf]
        %v321 = vld [vmem:[%s270 + $0x8] sm:$0xf]
        %v322 = vld [vmem:[%s270 + $0xc] sm:$0xf]
        %v323 = vld [vmem:[%s270 + $0x10] sm:$0xf]
        %v324 = vld [vmem:[%s270 + $0x14] sm:$0xf]
        %v325 = vld [vmem:[%s270 + $0x18] sm:$0xf]
        %v326 = vld [vmem:[%s270 + $0x1c] sm:$0xf]
        %v327 = vld [vmem:[%s270 + $0x20] sm:$0xf]
        %v328 = vld [vmem:[%s270 + $0x24] sm:$0xf]
        %v329 = vld [vmem:[%s270 + $0x28] sm:$0xf]
        %v330 = vld [vmem:[%s270 + $0x2c] sm:$0xf]
        %v331 = vld [vmem:[%s270 + $0x30] sm:$0xf]
        %v332 = vld [vmem:[%s270 + $0x34] sm:$0xf]
        %v333 = vld [vmem:[%s270 + $0x38] sm:$0xf]
        %v334 = vld [vmem:[%s270 + $0x3c] sm:$0xf]
        %v335 = vld [vmem:[%s270 + $0x40] sm:$0xf]
        %v336 = vld [vmem:[%s270 + $0x44] sm:$0xf]
        %v337 = vld [vmem:[%s270 + $0x48] sm:$0xf]
        %v338 = vld [vmem:[%s270 + $0x4c] sm:$0xf]
        %v339 = vld [vmem:[%s270 + $0x50] sm:$0xf]
        %v340 = vld [vmem:[%s270 + $0x54] sm:$0xf]
        %v341 = vld [vmem:[%s270 + $0x58] sm:$0xf]
        %v342 = vld [vmem:[%s270 + $0x5c] sm:$0xf]
        %v343 = vld [vmem:[%s270 + $0x60] sm:$0xf]
        %v344 = vld [vmem:[%s270 + $0x64] sm:$0xf]
        %v345 = vld [vmem:[%s270 + $0x68] sm:$0xf]
        %v346 = vld [vmem:[%s270 + $0x6c] sm:$0xf]
        %v347 = vld [vmem:[%s270 + $0x70] sm:$0xf]
        %v348 = vld [vmem:[%s270 + $0x74] sm:$0xf]
        %v349 = vld [vmem:[%s270 + $0x78] sm:$0xf]
        %v350 = vld [vmem:[%s270 + $0x7c] sm:$0xf]
        %v383 = vunpack.c.l.b16 %v287
        %v384 = vunpack.c.h.b16 %v287
        %v385 = vunpack.c.l.b16 %v288
        %v386 = vunpack.c.h.b16 %v288
        %v387 = vunpack.c.l.b16 %v289
        %v388 = vunpack.c.h.b16 %v289
        %v389 = vunpack.c.l.b16 %v290
        %v390 = vunpack.c.h.b16 %v290
        %v391 = vunpack.c.l.b16 %v291
        %v392 = vunpack.c.h.b16 %v291
        %v393 = vunpack.c.l.b16 %v292
        %v394 = vunpack.c.h.b16 %v292
        %v395 = vunpack.c.l.b16 %v293
        %v396 = vunpack.c.h.b16 %v293
        %v397 = vunpack.c.l.b16 %v294
        %v398 = vunpack.c.h.b16 %v294
        %v399 = vunpack.c.l.b16 %v295
        %v400 = vunpack.c.h.b16 %v295
        %v401 = vunpack.c.l.b16 %v296
        %v402 = vunpack.c.h.b16 %v296
        %v403 = vunpack.c.l.b16 %v297
        %v404 = vunpack.c.h.b16 %v297
        %v405 = vunpack.c.l.b16 %v298
        %v406 = vunpack.c.h.b16 %v298
        %v407 = vunpack.c.l.b16 %v299
        %v408 = vunpack.c.h.b16 %v299
        %v409 = vunpack.c.l.b16 %v300
        %v410 = vunpack.c.h.b16 %v300
        %v411 = vunpack.c.l.b16 %v301
        %v412 = vunpack.c.h.b16 %v301
        %v413 = vunpack.c.l.b16 %v302
        %v414 = vunpack.c.h.b16 %v302
        %v415 = vunpack.c.l.b16 %v303
        %v416 = vunpack.c.h.b16 %v303
        %v417 = vunpack.c.l.b16 %v304
        %v418 = vunpack.c.h.b16 %v304
        %v419 = vunpack.c.l.b16 %v305
        %v420 = vunpack.c.h.b16 %v305
        %v421 = vunpack.c.l.b16 %v306
        %v422 = vunpack.c.h.b16 %v306
        %v423 = vunpack.c.l.b16 %v307
        %v424 = vunpack.c.h.b16 %v307
        %v425 = vunpack.c.l.b16 %v308
        %v426 = vunpack.c.h.b16 %v308
        %v427 = vunpack.c.l.b16 %v309
        %v428 = vunpack.c.h.b16 %v309
        %v429 = vunpack.c.l.b16 %v310
        %v430 = vunpack.c.h.b16 %v310
        %v431 = vunpack.c.l.b16 %v311
        %v432 = vunpack.c.h.b16 %v311
        %v433 = vunpack.c.l.b16 %v312
        %v434 = vunpack.c.h.b16 %v312
        %v435 = vunpack.c.l.b16 %v313
        %v436 = vunpack.c.h.b16 %v313
        %v437 = vunpack.c.l.b16 %v314
        %v438 = vunpack.c.h.b16 %v314
        %v439 = vunpack.c.l.b16 %v315
        %v440 = vunpack.c.h.b16 %v315
        %v441 = vunpack.c.l.b16 %v316
        %v442 = vunpack.c.h.b16 %v316
        %v443 = vunpack.c.l.b16 %v317
        %v444 = vunpack.c.h.b16 %v317
        %v445 = vunpack.c.l.b16 %v318
        %v446 = vunpack.c.h.b16 %v318
        %v447 = vpack.c.b16 %v385, %v383
        %v448 = vpack.c.b16 %v386, %v384
        %v449 = vpack.c.b16 %v389, %v387
        %v450 = vpack.c.b16 %v390, %v388
        %v451 = vpack.c.b16 %v393, %v391
        %v452 = vpack.c.b16 %v394, %v392
        %v453 = vpack.c.b16 %v397, %v395
        %v454 = vpack.c.b16 %v398, %v396
        %v455 = vpack.c.b16 %v401, %v399
        %v456 = vpack.c.b16 %v402, %v400
        %v457 = vpack.c.b16 %v405, %v403
        %v458 = vpack.c.b16 %v406, %v404
        %v459 = vpack.c.b16 %v409, %v407
        %v460 = vpack.c.b16 %v410, %v408
        %v461 = vpack.c.b16 %v413, %v411
        %v462 = vpack.c.b16 %v414, %v412
        %v463 = vpack.c.b16 %v417, %v415
        %v464 = vpack.c.b16 %v418, %v416
        %v465 = vpack.c.b16 %v421, %v419
        %v466 = vpack.c.b16 %v422, %v420
        %v467 = vpack.c.b16 %v425, %v423
        %v468 = vpack.c.b16 %v426, %v424
        %v469 = vpack.c.b16 %v429, %v427
        %v470 = vpack.c.b16 %v430, %v428
        %v471 = vpack.c.b16 %v433, %v431
        %v472 = vpack.c.b16 %v434, %v432
        %v473 = vpack.c.b16 %v437, %v435
        %v474 = vpack.c.b16 %v438, %v436
        %v475 = vpack.c.b16 %v441, %v439
        %v476 = vpack.c.b16 %v442, %v440
        %v477 = vpack.c.b16 %v445, %v443
        %v478 = vpack.c.b16 %v446, %v444
        %v543 = vunpack.c.l.b16 %v319
        %v544 = vunpack.c.l.b16 %v320
        %v545 = vunpack.c.l.b16 %v321
        %v546 = vunpack.c.l.b16 %v322
        %v547 = vunpack.c.l.b16 %v323
        %v548 = vunpack.c.l.b16 %v324
        %v549 = vunpack.c.l.b16 %v325
        %v550 = vunpack.c.l.b16 %v326
        %v551 = vunpack.c.l.b16 %v327
        %v552 = vunpack.c.l.b16 %v328
        %v553 = vunpack.c.l.b16 %v329
        %v554 = vunpack.c.l.b16 %v330
        %v555 = vunpack.c.l.b16 %v331
        %v556 = vunpack.c.l.b16 %v332
        %v557 = vunpack.c.l.b16 %v333
        %v558 = vunpack.c.l.b16 %v334
        %v559 = vunpack.c.l.b16 %v335
        %v560 = vunpack.c.l.b16 %v336
        %v561 = vunpack.c.l.b16 %v337
        %v562 = vunpack.c.l.b16 %v338
        %v563 = vunpack.c.l.b16 %v339
        %v564 = vunpack.c.l.b16 %v340
        %v565 = vunpack.c.l.b16 %v341
        %v566 = vunpack.c.l.b16 %v342
        %v567 = vunpack.c.l.b16 %v343
        %v568 = vunpack.c.l.b16 %v344
        %v569 = vunpack.c.l.b16 %v345
        %v570 = vunpack.c.l.b16 %v346
        %v571 = vunpack.c.l.b16 %v347
        %v572 = vunpack.c.l.b16 %v348
        %v573 = vunpack.c.l.b16 %v349
        %v574 = vunpack.c.l.b16 %v350
        %v575 = vpack.c.b16 %v544, %v543
        %v576 = vpack.c.b16 %v546, %v545
        %v577 = vpack.c.b16 %v548, %v547
        %v578 = vpack.c.b16 %v550, %v549
        %v579 = vpack.c.b16 %v552, %v551
        %v580 = vpack.c.b16 %v554, %v553
        %v581 = vpack.c.b16 %v556, %v555
        %v582 = vpack.c.b16 %v558, %v557
        %v583 = vpack.c.b16 %v560, %v559
        %v584 = vpack.c.b16 %v562, %v561
        %v585 = vpack.c.b16 %v564, %v563
        %v586 = vpack.c.b16 %v566, %v565
        %v587 = vpack.c.b16 %v568, %v567
        %v588 = vpack.c.b16 %v570, %v569
        %v589 = vpack.c.b16 %v572, %v571
        %v590 = vpack.c.b16 %v574, %v573
        %607 = vmatprep.subr.bf16.mxu0 0
        %608 = vmatpush1.bf16.msra.mxu0 %v575
        %609 = vmatprep.subr.bf16.mxu0 0
        %610 = vmatpush1.bf16.msra.mxu0 %v576
        %611 = vmatprep.subr.bf16.mxu0 0
        %612 = vmatpush1.bf16.msra.mxu0 %v577
        %613 = vmatprep.subr.bf16.mxu0 0
        %614 = vmatpush1.bf16.msra.mxu0 %v578
        %615 = vmatprep.subr.bf16.mxu0 0
        %616 = vmatpush1.bf16.msra.mxu0 %v579
        %617 = vmatprep.subr.bf16.mxu0 0
        %618 = vmatpush1.bf16.msra.mxu0 %v580
        %619 = vmatprep.subr.bf16.mxu0 0
        %620 = vmatpush1.bf16.msra.mxu0 %v581
        %621 = vmatprep.subr.bf16.mxu0 0
        %622 = vmatpush1.bf16.msra.mxu0 %v582
        %623 = vmatprep.subr.bf16.mxu0 0
        %624 = vmatpush1.bf16.msra.mxu0 %v583
        %625 = vmatprep.subr.bf16.mxu0 0
        %626 = vmatpush1.bf16.msra.mxu0 %v584
        %627 = vmatprep.subr.bf16.mxu0 0
        %628 = vmatpush1.bf16.msra.mxu0 %v585
        %629 = vmatprep.subr.bf16.mxu0 0
        %630 = vmatpush1.bf16.msra.mxu0 %v586
        %631 = vmatprep.subr.bf16.mxu0 0
        %632 = vmatpush1.bf16.msra.mxu0 %v587
        %633 = vmatprep.subr.bf16.mxu0 0
        %634 = vmatpush1.bf16.msra.mxu0 %v588
        %635 = vmatprep.subr.bf16.mxu0 0
        %636 = vmatpush1.bf16.msra.mxu0 %v589
        %637 = vmatprep.subr.bf16.mxu0 0
        %638 = vmatpush1.bf16.msra.mxu0 %v590
        %639 = vmatprep.mubr.bf16.mxu0 %v448
        %640 = vmatmul.mubr.bf16.gmra.mrb[0].mxu0 %v447
        %v641 = vpop.f32.mrb[0].mxu0
        %v642 = vadd.f32 0.0, %v641
        %v643 = vpop.f32.mrb[0].mxu0
        %v644 = vpop.f32.mrb[0].mxu0
        %v645 = vadd.f32 0.0, %v644
        %v646 = vpop.f32.mrb[0].mxu0
        %647 = vmatprep.mubr.bf16.mxu0 %v450
        %648 = vmatmul.mubr.bf16.gmra.mrb[0].mxu0 %v449
        %v649 = vpop.f32.mrb[0].mxu0
        %v650 = vadd.f32 0.0, %v649
        %v651 = vpop.f32.mrb[0].mxu0
        %v652 = vpop.f32.mrb[0].mxu0
        %v653 = vadd.f32 0.0, %v652
        %v654 = vpop.f32.mrb[0].mxu0
        %655 = vmatprep.mubr.bf16.mxu0 %v452
        %656 = vmatmul.mubr.bf16.gmra.mrb[0].mxu0 %v451
        %v657 = vpop.f32.mrb[0].mxu0
        %v658 = vadd.f32 0.0, %v657
        %v659 = vpop.f32.mrb[0].mxu0
        %v660 = vpop.f32.mrb[0].mxu0
        %v661 = vadd.f32 0.0, %v660
        %v662 = vpop.f32.mrb[0].mxu0
        %663 = vmatprep.mubr.bf16.mxu0 %v454
        %664 = vmatmul.mubr.bf16.gmra.mrb[0].mxu0 %v453
        %v665 = vpop.f32.mrb[0].mxu0
        %v666 = vadd.f32 0.0, %v665
        %v667 = vpop.f32.mrb[0].mxu0
        %v668 = vpop.f32.mrb[0].mxu0
        %v669 = vadd.f32 0.0, %v668
        %v670 = vpop.f32.mrb[0].mxu0
        %671 = vmatprep.mubr.bf16.mxu0 %v456
        %672 = vmatmul.mubr.bf16.gmra.mrb[0].mxu0 %v455
        %v673 = vpop.f32.mrb[0].mxu0
        %v674 = vadd.f32 0.0, %v673
        %v675 = vpop.f32.mrb[0].mxu0
        %v676 = vpop.f32.mrb[0].mxu0
        %v677 = vadd.f32 0.0, %v676
        %v678 = vpop.f32.mrb[0].mxu0
        %679 = vmatprep.mubr.bf16.mxu0 %v458
        %680 = vmatmul.mubr.bf16.gmra.mrb[0].mxu0 %v457
        %v681 = vpop.f32.mrb[0].mxu0
        %v682 = vadd.f32 0.0, %v681
        %v683 = vpop.f32.mrb[0].mxu0
        %v684 = vpop.f32.mrb[0].mxu0
        %v685 = vadd.f32 0.0, %v684
        %v686 = vpop.f32.mrb[0].mxu0
        %687 = vmatprep.mubr.bf16.mxu0 %v460
        %688 = vmatmul.mubr.bf16.gmra.mrb[0].mxu0 %v459
        %v689 = vpop.f32.mrb[0].mxu0
        %v690 = vadd.f32 0.0, %v689
        %v691 = vpop.f32.mrb[0].mxu0
        %v692 = vpop.f32.mrb[0].mxu0
        %v693 = vadd.f32 0.0, %v692
        %v694 = vpop.f32.mrb[0].mxu0
        %695 = vmatprep.mubr.bf16.mxu0 %v462
        %696 = vmatmul.mubr.bf16.gmra.mrb[0].mxu0 %v461
        %v697 = vpop.f32.mrb[0].mxu0
        %v698 = vadd.f32 0.0, %v697
        %v699 = vpop.f32.mrb[0].mxu0
        %v700 = vpop.f32.mrb[0].mxu0
        %v701 = vadd.f32 0.0, %v700
        %v702 = vpop.f32.mrb[0].mxu0
        %703 = vmatprep.mubr.bf16.mxu0 %v464
        %704 = vmatmul.mubr.bf16.gmra.mrb[0].mxu0 %v463
        %v705 = vpop.f32.mrb[0].mxu0
        %v706 = vadd.f32 0.0, %v705
        %v707 = vpop.f32.mrb[0].mxu0
        %v708 = vpop.f32.mrb[0].mxu0
        %v709 = vadd.f32 0.0, %v708
        %v710 = vpop.f32.mrb[0].mxu0
        %711 = vmatprep.mubr.bf16.mxu0 %v466
        %712 = vmatmul.mubr.bf16.gmra.mrb[0].mxu0 %v465
        %v713 = vpop.f32.mrb[0].mxu0
        %v714 = vadd.f32 0.0, %v713
        %v715 = vpop.f32.mrb[0].mxu0
        %v716 = vpop.f32.mrb[0].mxu0
        %v717 = vadd.f32 0.0, %v716
        %v718 = vpop.f32.mrb[0].mxu0
        %719 = vmatprep.mubr.bf16.mxu0 %v468
        %720 = vmatmul.mubr.bf16.gmra.mrb[0].mxu0 %v467
        %v721 = vpop.f32.mrb[0].mxu0
        %v722 = vadd.f32 0.0, %v721
        %v723 = vpop.f32.mrb[0].mxu0
        %v724 = vpop.f32.mrb[0].mxu0
        %v725 = vadd.f32 0.0, %v724
        %v726 = vpop.f32.mrb[0].mxu0
        %727 = vmatprep.mubr.bf16.mxu0 %v470
        %728 = vmatmul.mubr.bf16.gmra.mrb[0].mxu0 %v469
        %v729 = vpop.f32.mrb[0].mxu0
        %v730 = vadd.f32 0.0, %v729
        %v731 = vpop.f32.mrb[0].mxu0
        %v732 = vpop.f32.mrb[0].mxu0
        %v733 = vadd.f32 0.0, %v732
        %v734 = vpop.f32.mrb[0].mxu0
        %735 = vmatprep.mubr.bf16.mxu0 %v472
        %736 = vmatmul.mubr.bf16.gmra.mrb[0].mxu0 %v471
        %v737 = vpop.f32.mrb[0].mxu0
        %v738 = vadd.f32 0.0, %v737
        %v739 = vpop.f32.mrb[0].mxu0
        %v740 = vpop.f32.mrb[0].mxu0
        %v741 = vadd.f32 0.0, %v740
        %v742 = vpop.f32.mrb[0].mxu0
        %743 = vmatprep.mubr.bf16.mxu0 %v474
        %744 = vmatmul.mubr.bf16.gmra.mrb[0].mxu0 %v473
        %v745 = vpop.f32.mrb[0].mxu0
        %v746 = vadd.f32 0.0, %v745
        %v747 = vpop.f32.mrb[0].mxu0
        %v748 = vpop.f32.mrb[0].mxu0
        %v749 = vadd.f32 0.0, %v748
        %v750 = vpop.f32.mrb[0].mxu0
        %751 = vmatprep.mubr.bf16.mxu0 %v476
        %752 = vmatmul.mubr.bf16.gmra.mrb[0].mxu0 %v475
        %v753 = vpop.f32.mrb[0].mxu0
        %v754 = vadd.f32 0.0, %v753
        %v755 = vpop.f32.mrb[0].mxu0
        %v756 = vpop.f32.mrb[0].mxu0
        %v757 = vadd.f32 0.0, %v756
        %v758 = vpop.f32.mrb[0].mxu0
        %759 = vmatprep.mubr.bf16.mxu0 %v478
        %760 = vmatmul.mubr.bf16.gmra.mrb[0].mxu0 %v477
        %v761 = vpop.f32.mrb[0].mxu0
        %v762 = vadd.f32 0.0, %v761
        %v763 = vpop.f32.mrb[0].mxu0
        %v764 = vpop.f32.mrb[0].mxu0
        %v765 = vadd.f32 0.0, %v764
        %v766 = vpop.f32.mrb[0].mxu0
        %767 = vdwg.mxu0
        %v768 = vld [vmem:[%s273] sm:$0x1]
        %v770 = vlaneseq
        %v771 = vshrl.u32 %v770, 7
        %v772 = vsub.s32 0, %v771
        %v773 = vrot.slane %v768, %v772
        %v775 = vmul.f32 %v642, %v773
        %v776 = vmul.f32 %v645, %v773
        %v777 = vmul.f32 %v650, %v773
        %v778 = vmul.f32 %v653, %v773
        %v779 = vmul.f32 %v658, %v773
        %v780 = vmul.f32 %v661, %v773
        %v781 = vmul.f32 %v666, %v773
        %v782 = vmul.f32 %v669, %v773
        %v783 = vmul.f32 %v674, %v773
        %v784 = vmul.f32 %v677, %v773
        %v785 = vmul.f32 %v682, %v773
        %v786 = vmul.f32 %v685, %v773
        %v787 = vmul.f32 %v690, %v773
        %v788 = vmul.f32 %v693, %v773
        %v789 = vmul.f32 %v698, %v773
        %v790 = vmul.f32 %v701, %v773
        %v791 = vmul.f32 %v706, %v773
        %v792 = vmul.f32 %v709, %v773
        %v793 = vmul.f32 %v714, %v773
        %v794 = vmul.f32 %v717, %v773
        %v795 = vmul.f32 %v722, %v773
        %v796 = vmul.f32 %v725, %v773
        %v797 = vmul.f32 %v730, %v773
        %v798 = vmul.f32 %v733, %v773
        %v799 = vmul.f32 %v738, %v773
        %v800 = vmul.f32 %v741, %v773
        %v801 = vmul.f32 %v746, %v773
        %v802 = vmul.f32 %v749, %v773
        %v803 = vmul.f32 %v754, %v773
        %v804 = vmul.f32 %v757, %v773
        %v805 = vmul.f32 %v762, %v773
        %v806 = vmul.f32 %v765, %v773
        %v807 = vld [vmem:[%s276] sm:$0x1]
        %v809 = vlaneseq
        %v810 = vshrl.u32 %v809, 7
        %v811 = vsub.s32 0, %v810
        %v812 = vrot.slane %v807, %v811
        %v814 = vadd.f32 %v775, %v812
        %v815 = vadd.f32 %v776, %v812
        %v816 = vadd.f32 %v777, %v812
        %v817 = vadd.f32 %v778, %v812
        %v818 = vadd.f32 %v779, %v812
        %v819 = vadd.f32 %v780, %v812
        %v820 = vadd.f32 %v781, %v812
        %v821 = vadd.f32 %v782, %v812
        %v822 = vadd.f32 %v783, %v812
        %v823 = vadd.f32 %v784, %v812
        %v824 = vadd.f32 %v785, %v812
        %v825 = vadd.f32 %v786, %v812
        %v826 = vadd.f32 %v787, %v812
        %v827 = vadd.f32 %v788, %v812
        %v828 = vadd.f32 %v789, %v812
        %v829 = vadd.f32 %v790, %v812
        %v830 = vadd.f32 %v791, %v812
        %v831 = vadd.f32 %v792, %v812
        %v832 = vadd.f32 %v793, %v812
        %v833 = vadd.f32 %v794, %v812
        %v834 = vadd.f32 %v795, %v812
        %v835 = vadd.f32 %v796, %v812
        %v836 = vadd.f32 %v797, %v812
        %v837 = vadd.f32 %v798, %v812
        %v838 = vadd.f32 %v799, %v812
        %v839 = vadd.f32 %v800, %v812
        %v840 = vadd.f32 %v801, %v812
        %v841 = vadd.f32 %v802, %v812
        %v842 = vadd.f32 %v803, %v812
        %v843 = vadd.f32 %v804, %v812
        %v844 = vadd.f32 %v805, %v812
        %v845 = vadd.f32 %v806, %v812
        %v846 = vmax.f32 %v814, 0.0
        %v847 = vmax.f32 %v815, 0.0
        %v848 = vmax.f32 %v816, 0.0
        %v849 = vmax.f32 %v817, 0.0
        %v850 = vmax.f32 %v818, 0.0
        %v851 = vmax.f32 %v819, 0.0
        %v852 = vmax.f32 %v820, 0.0
        %v853 = vmax.f32 %v821, 0.0
        %v854 = vmax.f32 %v822, 0.0
        %v855 = vmax.f32 %v823, 0.0
        %v856 = vmax.f32 %v824, 0.0
        %v857 = vmax.f32 %v825, 0.0
        %v858 = vmax.f32 %v826, 0.0
        %v859 = vmax.f32 %v827, 0.0
        %v860 = vmax.f32 %v828, 0.0
        %v861 = vmax.f32 %v829, 0.0
        %v862 = vmax.f32 %v830, 0.0
        %v863 = vmax.f32 %v831, 0.0
        %v864 = vmax.f32 %v832, 0.0
        %v865 = vmax.f32 %v833, 0.0
        %v866 = vmax.f32 %v834, 0.0
        %v867 = vmax.f32 %v835, 0.0
        %v868 = vmax.f32 %v836, 0.0
        %v869 = vmax.f32 %v837, 0.0
        %v870 = vmax.f32 %v838, 0.0
        %v871 = vmax.f32 %v839, 0.0
        %v872 = vmax.f32 %v840, 0.0
        %v873 = vmax.f32 %v841, 0.0
        %v874 = vmax.f32 %v842, 0.0
        %v875 = vmax.f32 %v843, 0.0
        %v876 = vmax.f32 %v844, 0.0
        %v877 = vmax.f32 %v845, 0.0
        %v878 = vpack.c.bf16 %v847, %v846
        %v879 = vpack.c.bf16 %v849, %v848
        %v880 = vpack.c.bf16 %v851, %v850
        %v881 = vpack.c.bf16 %v853, %v852
        %v882 = vpack.c.bf16 %v855, %v854
        %v883 = vpack.c.bf16 %v857, %v856
        %v884 = vpack.c.bf16 %v859, %v858
        %v885 = vpack.c.bf16 %v861, %v860
        %v886 = vpack.c.bf16 %v863, %v862
        %v887 = vpack.c.bf16 %v865, %v864
        %v888 = vpack.c.bf16 %v867, %v866
        %v889 = vpack.c.bf16 %v869, %v868
        %v890 = vpack.c.bf16 %v871, %v870
        %v891 = vpack.c.bf16 %v873, %v872
        %v892 = vpack.c.bf16 %v875, %v874
        %v893 = vpack.c.bf16 %v877, %v876
        %v910 = vunpack.c.l.b16 %v878
        %v911 = vunpack.c.h.b16 %v878
        %v912 = vunpack.c.l.b16 %v879
        %v913 = vunpack.c.h.b16 %v879
        %v914 = vunpack.c.l.b16 %v880
        %v915 = vunpack.c.h.b16 %v880
        %v916 = vunpack.c.l.b16 %v881
        %v917 = vunpack.c.h.b16 %v881
        %v918 = vunpack.c.l.b16 %v882
        %v919 = vunpack.c.h.b16 %v882
        %v920 = vunpack.c.l.b16 %v883
        %v921 = vunpack.c.h.b16 %v883
        %v922 = vunpack.c.l.b16 %v884
        %v923 = vunpack.c.h.b16 %v884
        %v924 = vunpack.c.l.b16 %v885
        %v925 = vunpack.c.h.b16 %v885
        %v926 = vunpack.c.l.b16 %v886
        %v927 = vunpack.c.h.b16 %v886
        %v928 = vunpack.c.l.b16 %v887
        %v929 = vunpack.c.h.b16 %v887
        %v930 = vunpack.c.l.b16 %v888
        %v931 = vunpack.c.h.b16 %v888
        %v932 = vunpack.c.l.b16 %v889
        %v933 = vunpack.c.h.b16 %v889
        %v934 = vunpack.c.l.b16 %v890
        %v935 = vunpack.c.h.b16 %v890
        %v936 = vunpack.c.l.b16 %v891
        %v937 = vunpack.c.h.b16 %v891
        %v938 = vunpack.c.l.b16 %v892
        %v939 = vunpack.c.h.b16 %v892
        %v940 = vunpack.c.l.b16 %v893
        %v941 = vunpack.c.h.b16 %v893
        %v942 = vpack.c.b16 %v910, %v910
        %v943 = vpack.c.b16 %v911, %v911
        %v944 = vpack.c.b16 %v912, %v912
        %v945 = vpack.c.b16 %v913, %v913
        %v946 = vpack.c.b16 %v914, %v914
        %v947 = vpack.c.b16 %v915, %v915
        %v948 = vpack.c.b16 %v916, %v916
        %v949 = vpack.c.b16 %v917, %v917
        %v950 = vpack.c.b16 %v918, %v918
        %v951 = vpack.c.b16 %v919, %v919
        %v952 = vpack.c.b16 %v920, %v920
        %v953 = vpack.c.b16 %v921, %v921
        %v954 = vpack.c.b16 %v922, %v922
        %v955 = vpack.c.b16 %v923, %v923
        %v956 = vpack.c.b16 %v924, %v924
        %v957 = vpack.c.b16 %v925, %v925
        %v958 = vpack.c.b16 %v926, %v926
        %v959 = vpack.c.b16 %v927, %v927
        %v960 = vpack.c.b16 %v928, %v928
        %v961 = vpack.c.b16 %v929, %v929
        %v962 = vpack.c.b16 %v930, %v930
        %v963 = vpack.c.b16 %v931, %v931
        %v964 = vpack.c.b16 %v932, %v932
        %v965 = vpack.c.b16 %v933, %v933
        %v966 = vpack.c.b16 %v934, %v934
        %v967 = vpack.c.b16 %v935, %v935
        %v968 = vpack.c.b16 %v936, %v936
        %v969 = vpack.c.b16 %v937, %v937
        %v970 = vpack.c.b16 %v938, %v938
        %v971 = vpack.c.b16 %v939, %v939
        %v972 = vpack.c.b16 %v940, %v940
        %v973 = vpack.c.b16 %v941, %v941
        %vm1006 = vcmask 519168
        %1007 = vst.msk [vmem:[%s284] sm:$0xf] %vm1006, %v942
        %1008 = vst.msk [vmem:[%s284 + $0x4] sm:$0xf] %vm1006, %v943
        %1009 = vst.msk [vmem:[%s284 + $0x8] sm:$0xf] %vm1006, %v944
        %1010 = vst.msk [vmem:[%s284 + $0xc] sm:$0xf] %vm1006, %v945
        %1011 = vst.msk [vmem:[%s284 + $0x10] sm:$0xf] %vm1006, %v946
        %1012 = vst.msk [vmem:[%s284 + $0x14] sm:$0xf] %vm1006, %v947
        %1013 = vst.msk [vmem:[%s284 + $0x18] sm:$0xf] %vm1006, %v948
        %1014 = vst.msk [vmem:[%s284 + $0x1c] sm:$0xf] %vm1006, %v949
        %1015 = vst.msk [vmem:[%s284 + $0x20] sm:$0xf] %vm1006, %v950
        %1016 = vst.msk [vmem:[%s284 + $0x24] sm:$0xf] %vm1006, %v951
        %1017 = vst.msk [vmem:[%s284 + $0x28] sm:$0xf] %vm1006, %v952
        %1018 = vst.msk [vmem:[%s284 + $0x2c] sm:$0xf] %vm1006, %v953
        %1019 = vst.msk [vmem:[%s284 + $0x30] sm:$0xf] %vm1006, %v954
        %1020 = vst.msk [vmem:[%s284 + $0x34] sm:$0xf] %vm1006, %v955
        %1021 = vst.msk [vmem:[%s284 + $0x38] sm:$0xf] %vm1006, %v956
        %1022 = vst.msk [vmem:[%s284 + $0x3c] sm:$0xf] %vm1006, %v957
        %1023 = vst.msk [vmem:[%s284 + $0x40] sm:$0xf] %vm1006, %v958
        %1024 = vst.msk [vmem:[%s284 + $0x44] sm:$0xf] %vm1006, %v959
        %1025 = vst.msk [vmem:[%s284 + $0x48] sm:$0xf] %vm1006, %v960
        %1026 = vst.msk [vmem:[%s284 + $0x4c] sm:$0xf] %vm1006, %v961
        %1027 = vst.msk [vmem:[%s284 + $0x50] sm:$0xf] %vm1006, %v962
        %1028 = vst.msk [vmem:[%s284 + $0x54] sm:$0xf] %vm1006, %v963
        %1029 = vst.msk [vmem:[%s284 + $0x58] sm:$0xf] %vm1006, %v964
        %1030 = vst.msk [vmem:[%s284 + $0x5c] sm:$0xf] %vm1006, %v965
        %1031 = vst.msk [vmem:[%s284 + $0x60] sm:$0xf] %vm1006, %v966
        %1032 = vst.msk [vmem:[%s284 + $0x64] sm:$0xf] %vm1006, %v967
        %1033 = vst.msk [vmem:[%s284 + $0x68] sm:$0xf] %vm1006, %v968
        %1034 = vst.msk [vmem:[%s284 + $0x6c] sm:$0xf] %vm1006, %v969
        %1035 = vst.msk [vmem:[%s284 + $0x70] sm:$0xf] %vm1006, %v970
        %1036 = vst.msk [vmem:[%s284 + $0x74] sm:$0xf] %vm1006, %v971
        %1037 = vst.msk [vmem:[%s284 + $0x78] sm:$0xf] %vm1006, %v972
        %1038 = vst.msk [vmem:[%s284 + $0x7c] sm:$0xf] %vm1006, %v973
        %s1039 = smul.u32 32, %s22
        %p1040 = scmp.lt.s32.totalorder %s1039, 63
        %s1041 = scalar_select %p1040, %s1039, 63
        %p1042 = scmp.lt.s32.totalorder %s23, 0
        %s1043 = scalar_select %p1042, %s23, 0
        %s1044 = sadd.s32 %s1043, %s1041
        %s1045 = smul.addr %s1044, 4
        %s1046 = scalar_lea.vmem %s4, %s1045
        // Predicated region
        $region41: #{tpu_custom_call.1} parent=35 // pred_check
          %p1047 = pneg %p154
        $region42: #{tpu_custom_call.1} parent=35 // pred_check_branch
          %1049 = sbr.rel (%p1047) target = $region44
        $region43: #{tpu_custom_call.1} parent=35 // pred_region
          %s1050 = smul.u32 32, %s22
        $region44: #{tpu_custom_call.1} parent=35 // pred_fallthru
          _
      $region36: #{tpu_custom_call.1} parent=5 // pred_fallthru
        _
      %p1051 = scmp.le.s32.totalorder 2, %s13
      // Predicated region
      $region45: #{tpu_custom_call.1} parent=5 // pred_check
        %p1052 = pneg %p1051
      $region46: #{tpu_custom_call.1} parent=5 // pred_check_branch
        %1054 = sbr.rel (%p1052) target = $region48
      $region47: #{tpu_custom_call.1} parent=5 // pred_region
        %s1055 = ssub.s32 %s13, 2
        // Predicated region
        $region49: #{tpu_custom_call.1} parent=47 // pred_check
          %p1056 = pneg %p160
        $region50: #{tpu_custom_call.1} parent=47 // pred_check_branch
          %1058 = sbr.rel (%p1056) target = $region52
        $region51: #{tpu_custom_call.1} parent=47 // pred_region
          %s1059 = smul.u32 32, %s24
          %p1060 = scmp.lt.s32.totalorder %s1059, 63
          %s1061 = scalar_select %p1060, %s1059, 63
          %p1062 = scmp.lt.s32.totalorder %s25, 0
          %s1063 = scalar_select %p1062, %s25, 0
          %s1064 = sadd.s32 %s1063, %s1061
          %s1065 = smul.addr %s1064, 4
          %s1066 = scalar_lea.vmem %s4, %s1065
        $region52: #{tpu_custom_call.1} parent=47 // pred_fallthru
          _
      $region48: #{tpu_custom_call.1} parent=5 // pred_fallthru
        _
    $region6: #{tpu_custom_call.1} parent=1 // loop_footer
      %s17 = sadd.s32 1, %s13
    $region7: #{tpu_custom_call.1} parent=1 // loop_footer_branch
      %12 = sbr.rel target = $region3
    $region8: #{tpu_custom_call.1} parent=1 // loop_exit
      _
    %1067 = vsyncpa [#allocation3], 1
    %s1068 = scalar_lea.sflag [#allocation3], 1
    %1069 = vsyncpa %s1068, 1

</llo_original>
